<compile_context>
chip_gen: v7x
topology: tpu7x:2x2x1
jax: 0.10.0
libtpu: 0.0.40
codegen_flags: <defaults>
</compile_context>

<pallas_src>
import functools
import math

import jax
import jax.numpy as jnp
from jax.experimental import pallas as pl
from jax.experimental.pallas import tpu as pltpu


def _mha_kernel(x_ref, wqkv_ref, bqkv_ref, wo_ref, bo_ref, hmask_ref,
                blockones_ref, out_ref, attn_ref, *, num_heads):
    D = x_ref.shape[2]
    H = num_heads

    x = x_ref[0]                                                     # (S, D)

    # Fused QKV projection: one (S, D) @ (D, 3D) MXU call.
    # (1/sqrt(head_dim) is already folded into the Q columns / Q bias.)
    qkv = jnp.dot(x, wqkv_ref[...], preferred_element_type=jnp.float32)
    qkv = qkv + bqkv_ref[...]                                        # (S, 3D)

    q = qkv[:, :D]                                                   # (S, D)
    k = qkv[:, D:2 * D]                                              # (S, D)
    v = qkv[:, 2 * D:]                                               # (S, D)

    # Head-block expansion: row h*S + j of k_exp / v_exp holds K[j] / V[j]
    # masked to head h's feature columns.  hmask[h*S + j, r] = (r//hd == h).
    hmask = hmask_ref[...]                                           # (H*S, D)
    k_exp = jnp.concatenate([k] * H, axis=0) * hmask                 # (H*S, D)
    v_exp = jnp.concatenate([v] * H, axis=0) * hmask                 # (H*S, D)

    # All-head scores in one MXU call, lane-dense: s[q, h*S + j] = q_h . k_h[j]
    s = jax.lax.dot_general(q, k_exp, (((1,), (1,)), ((), ())),
                            preferred_element_type=jnp.float32)      # (S, H*S)

    # Segmented softmax over each head's S-key block.  A global per-row max
    # shift keeps exp() bounded (softmax is shift-invariant per block); the
    # per-block denominator is a segment-sum via a block-diagonal ones matmul.
    m = jnp.max(s, axis=-1, keepdims=True)
    p = jnp.exp(s - m)                                               # (S, H*S)
    denom = jnp.dot(p, blockones_ref[...],
                    preferred_element_type=jnp.float32)              # (S, H*S)
    attn = p / denom                                                 # (S, H*S)

    # Lane-dense attention store; wrapper re-layouts to (B, H, S, S).
    attn_ref[0] = attn

    # Context for all heads in one matmul; column layout is head-major, i.e.
    # exactly torch's transpose(1,2).contiguous().view(B, S, D).
    ctx = jnp.dot(attn, v_exp, preferred_element_type=jnp.float32)   # (S, D)

    # Fused output projection: one (S, D) @ (D, D) MXU call, written once.
    out_ref[0] = (jnp.dot(ctx, wo_ref[...],
                          preferred_element_type=jnp.float32)
                  + bo_ref[...]).astype(out_ref.dtype)


def attention_forward(x, params, num_heads):
    """x: (B, S, D) float32.  params: (Wq, bq, Wk, bk, Wv, bv, Wo, bo) in
    torch nn.Linear convention (weight shape (out, in))."""
    B, S, D = x.shape
    H = num_heads
    assert D % H == 0
    hd = D // H
    Wq, bq, Wk, bk, Wv, bv, Wo, bo = params

    scale = 1.0 / math.sqrt(hd)

    # One-time weight repack (constant fold, not per-call compute):
    #   fused QKV weight (D, 3D) with the softmax scale folded into Q,
    #   transposed output projection (D, D).
    w_qkv = jnp.concatenate([Wq.T * scale, Wk.T, Wv.T], axis=1)      # (D, 3D)
    b_qkv = jnp.concatenate([bq * scale, bk, bv]).reshape(1, 3 * D)
    wo_t = Wo.T                                                      # (D, D)
    bo2 = bo.reshape(1, D)

    # Constant head-structure matrices (loaded once into VMEM).
    row_head = (jnp.arange(H * S) // S)[:, None]                     # (H*S, 1)
    col_head = (jnp.arange(D) // hd)[None, :]                        # (1, D)
    hmask = (row_head == col_head).astype(jnp.float32)               # (H*S, D)
    blk = jnp.arange(H * S) // S
    blockones = (blk[:, None] == blk[None, :]).astype(jnp.float32)   # (H*S, H*S)

    kernel = functools.partial(_mha_kernel, num_heads=H)

    grid = (B,)
    in_specs = [
        pl.BlockSpec((1, S, D), lambda b: (b, 0, 0)),        # x (per batch)
        pl.BlockSpec((D, 3 * D), lambda b: (0, 0)),          # fused QKV weight
        pl.BlockSpec((1, 3 * D), lambda b: (0, 0)),          # fused QKV bias
        pl.BlockSpec((D, D), lambda b: (0, 0)),              # Wo^T
        pl.BlockSpec((1, D), lambda b: (0, 0)),              # bo
        pl.BlockSpec((H * S, D), lambda b: (0, 0)),          # head mask
        pl.BlockSpec((H * S, H * S), lambda b: (0, 0)),      # block-diag ones
    ]
    out_specs = [
        pl.BlockSpec((1, S, D), lambda b: (b, 0, 0)),        # output
        pl.BlockSpec((1, S, H * S), lambda b: (b, 0, 0)),    # attn (lane-dense)
    ]
    out_shapes = [
        jax.ShapeDtypeStruct((B, S, D), jnp.float32),
        jax.ShapeDtypeStruct((B, S, H * S), jnp.float32),
    ]

    out, attn_cat = pl.pallas_call(
        kernel,
        out_shape=out_shapes,
        grid_spec=pltpu.PrefetchScalarGridSpec(
            num_scalar_prefetch=0,
            grid=grid,
            in_specs=in_specs,
            out_specs=out_specs,
        ),
        compiler_params=pltpu.CompilerParams(
            dimension_semantics=("parallel",)),
    )(x, w_qkv, b_qkv, wo_t, bo2, hmask, blockones)

    # (B, S, H*S) -> (B, S, H, S) -> (B, H, S, S): wrapper-side layout plumbing.
    attn = attn_cat.reshape(B, S, H, S).transpose(0, 2, 1, 3)
    return out, attn


def _reference(x, params, num_heads):
    """Pure-JAX reference mirroring the PyTorch forward (dropout=identity)."""
    B, S, D = x.shape
    H = num_heads
    hd = D // H
    Wq, bq, Wk, bk, Wv, bv, Wo, bo = params
    q = (x @ Wq.T + bq).reshape(B, S, H, hd).transpose(0, 2, 1, 3)
    k = (x @ Wk.T + bk).reshape(B, S, H, hd).transpose(0, 2, 1, 3)
    v = (x @ Wv.T + bv).reshape(B, S, H, hd).transpose(0, 2, 1, 3)
    scores = jnp.einsum("bhqd,bhkd->bhqk", q, k) / math.sqrt(hd)
    attn = jax.nn.softmax(scores, axis=-1)
    ctx = jnp.einsum("bhqk,bhkd->bhqd", attn, v)
    ctx = ctx.transpose(0, 2, 1, 3).reshape(B, S, D)
    out = ctx @ Wo.T + bo
    return out, attn


if __name__ == "__main__":
    # Small shapes consistent with the module: batch=2, seq=8, input_dim=32,
    # num_heads=8 -> head_dim=4.  (hidden_dim is unused in forward.)
    B, S, D, H = 2, 8, 32, 8

    key = jax.random.PRNGKey(0)
    keys = jax.random.split(key, 9)
    bound = 1.0 / math.sqrt(D)

    def lin(kw, kb):
        W = jax.random.uniform(kw, (D, D), jnp.float32, -bound, bound)
        b = jax.random.uniform(kb, (D,), jnp.float32, -bound, bound)
        return W, b

    Wq, bq = lin(keys[0], keys[1])
    Wk, bk = lin(keys[2], keys[3])
    Wv, bv = lin(keys[4], keys[5])
    Wo, bo = lin(keys[6], keys[7])
    params = (Wq, bq, Wk, bk, Wv, bv, Wo, bo)

    x = jax.random.normal(keys[8], (B, S, D), jnp.float32)

    out, attn = attention_forward(x, params, H)
    out = jax.block_until_ready(out)
    attn = jax.block_until_ready(attn)

    out_ref, attn_ref = _reference(x, params, H)
    assert out.shape == (B, S, D) and attn.shape == (B, H, S, S)
    assert jnp.allclose(out, out_ref, atol=1e-5, rtol=1e-5), "output mismatch"
    assert jnp.allclose(attn, attn_ref, atol=1e-5, rtol=1e-5), "attn mismatch"

    print("KERNEL_OK")
</pallas_src>

<mosaic_0001>
module attributes {stable_mosaic.version = 11 : i64} {
  func.func @_mha_kernel(%arg0: i32, %arg1: memref<1x8x32xf32, #tpu.memory_space<vmem>>, %arg2: memref<32x96xf32, #tpu.memory_space<vmem>>, %arg3: memref<1x96xf32, #tpu.memory_space<vmem>>, %arg4: memref<32x32xf32, #tpu.memory_space<vmem>>, %arg5: memref<1x32xf32, #tpu.memory_space<vmem>>, %arg6: memref<64x32xf32, #tpu.memory_space<vmem>>, %arg7: memref<64x64xf32, #tpu.memory_space<vmem>>, %arg8: memref<1x8x32xf32, #tpu.memory_space<vmem>>, %arg9: memref<1x8x64xf32, #tpu.memory_space<vmem>>) attributes {dimension_semantics = [#tpu.dimension_semantics<parallel>], iteration_bounds = array<i64: 2>, scalar_prefetch = 0 : i64, scratch_operands = 0 : i64, tpu.core_type = #tpu.core_type<tc>, window_params = [{transform_indices = @transform_0, window_bounds = array<i64: 1, 8, 32>}, {pipeline_mode = #tpu.pipeline_mode<synchronous>, transform_indices = @transform_1, window_bounds = array<i64: 32, 96>}, {pipeline_mode = #tpu.pipeline_mode<synchronous>, transform_indices = @transform_2, window_bounds = array<i64: 1, 96>}, {pipeline_mode = #tpu.pipeline_mode<synchronous>, transform_indices = @transform_3, window_bounds = array<i64: 32, 32>}, {pipeline_mode = #tpu.pipeline_mode<synchronous>, transform_indices = @transform_4, window_bounds = array<i64: 1, 32>}, {pipeline_mode = #tpu.pipeline_mode<synchronous>, transform_indices = @transform_5, window_bounds = array<i64: 64, 32>}, {pipeline_mode = #tpu.pipeline_mode<synchronous>, transform_indices = @transform_6, window_bounds = array<i64: 64, 64>}, {transform_indices = @transform_7, window_bounds = array<i64: 1, 8, 32>}, {transform_indices = @transform_8, window_bounds = array<i64: 1, 8, 64>}]} {
    %c0 = arith.constant 0 : index
    %c0_0 = arith.constant 0 : index
    %c0_1 = arith.constant 0 : index
    %0 = vector.load %arg1[%c0, %c0_0, %c0_1] : memref<1x8x32xf32, #tpu.memory_space<vmem>>, vector<1x8x32xf32>
    %1 = vector.shape_cast %0 : vector<1x8x32xf32> to vector<8x32xf32>
    %c0_2 = arith.constant 0 : index
    %c0_3 = arith.constant 0 : index
    %2 = vector.load %arg2[%c0_2, %c0_3] : memref<32x96xf32, #tpu.memory_space<vmem>>, vector<32x96xf32>
    %cst = arith.constant dense<0.000000e+00> : vector<8x96xf32>
    %3 = tpu.matmul %1, %2, %cst {dimension_numbers = #tpu.dot_dimension_numbers<[1], [0], [0], [1], [0, 0, 1, 1], [], []>} : vector<8x32xf32>, vector<32x96xf32>, vector<8x96xf32> -> vector<8x96xf32>
    %c0_4 = arith.constant 0 : index
    %c0_5 = arith.constant 0 : index
    %4 = vector.load %arg3[%c0_4, %c0_5] : memref<1x96xf32, #tpu.memory_space<vmem>>, vector<1x96xf32>
    %5 = vector.broadcast %4 : vector<1x96xf32> to vector<8x96xf32>
    %6 = arith.addf %3, %5 : vector<8x96xf32>
    %7 = vector.extract_strided_slice %6 {offsets = [0, 0], sizes = [8, 32], strides = [1, 1]} : vector<8x96xf32> to vector<8x32xf32>
    %8 = vector.extract_strided_slice %6 {offsets = [0, 32], sizes = [8, 32], strides = [1, 1]} : vector<8x96xf32> to vector<8x32xf32>
    %9 = vector.extract_strided_slice %6 {offsets = [0, 64], sizes = [8, 32], strides = [1, 1]} : vector<8x96xf32> to vector<8x32xf32>
    %c0_6 = arith.constant 0 : index
    %c0_7 = arith.constant 0 : index
    %10 = vector.load %arg6[%c0_6, %c0_7] : memref<64x32xf32, #tpu.memory_space<vmem>>, vector<64x32xf32>
    %11 = tpu.concatenate %8, %8, %8, %8, %8, %8, %8, %8 in 0 : vector<8x32xf32>, vector<8x32xf32>, vector<8x32xf32>, vector<8x32xf32>, vector<8x32xf32>, vector<8x32xf32>, vector<8x32xf32>, vector<8x32xf32> -> vector<64x32xf32>
    %12 = arith.mulf %11, %10 : vector<64x32xf32>
    %13 = tpu.concatenate %9, %9, %9, %9, %9, %9, %9, %9 in 0 : vector<8x32xf32>, vector<8x32xf32>, vector<8x32xf32>, vector<8x32xf32>, vector<8x32xf32>, vector<8x32xf32>, vector<8x32xf32>, vector<8x32xf32> -> vector<64x32xf32>
    %14 = arith.mulf %13, %10 : vector<64x32xf32>
    %cst_8 = arith.constant dense<0.000000e+00> : vector<8x64xf32>
    %15 = tpu.matmul %7, %12, %cst_8 {dimension_numbers = #tpu.dot_dimension_numbers<[1], [1], [0], [0], [0, 0, 1, 0], [], []>} : vector<8x32xf32>, vector<64x32xf32>, vector<8x64xf32> -> vector<8x64xf32>
    %cst_9 = arith.constant dense<0xFF800000> : vector<8xf32>
    %16 = vector.multi_reduction <maximumf>, %15, %cst_9 [1] : vector<8x64xf32> to vector<8xf32>
    %17 = vector.shape_cast %16 : vector<8xf32> to vector<8x1xf32>
    %18 = vector.broadcast %17 : vector<8x1xf32> to vector<8x64xf32>
    %19 = arith.subf %15, %18 : vector<8x64xf32>
    %20 = math.exp %19 : vector<8x64xf32>
    %c0_10 = arith.constant 0 : index
    %c0_11 = arith.constant 0 : index
    %21 = vector.load %arg7[%c0_10, %c0_11] : memref<64x64xf32, #tpu.memory_space<vmem>>, vector<64x64xf32>
    %cst_12 = arith.constant dense<0.000000e+00> : vector<8x64xf32>
    %22 = tpu.matmul %20, %21, %cst_12 {dimension_numbers = #tpu.dot_dimension_numbers<[1], [0], [0], [1], [0, 0, 1, 1], [], []>} : vector<8x64xf32>, vector<64x64xf32>, vector<8x64xf32> -> vector<8x64xf32>
    %23 = arith.divf %20, %22 : vector<8x64xf32>
    %c0_13 = arith.constant 0 : index
    %c0_14 = arith.constant 0 : index
    %c0_15 = arith.constant 0 : index
    %24 = vector.load %arg9[%c0_13, %c0_14, %c0_15] : memref<1x8x64xf32, #tpu.memory_space<vmem>>, vector<1x8x64xf32>
    %25 = vector.shape_cast %24 : vector<1x8x64xf32> to vector<8x64xf32>
    %26 = vector.shape_cast %23 : vector<8x64xf32> to vector<1x8x64xf32>
    tpu.vector_store %arg9[%c0_13, %c0_14, %c0_15], %26 {strides = array<i32>} : memref<1x8x64xf32, #tpu.memory_space<vmem>>, vector<1x8x64xf32>,
    %cst_16 = arith.constant dense<0.000000e+00> : vector<8x32xf32>
    %27 = tpu.matmul %23, %14, %cst_16 {dimension_numbers = #tpu.dot_dimension_numbers<[1], [0], [0], [1], [0, 0, 1, 1], [], []>} : vector<8x64xf32>, vector<64x32xf32>, vector<8x32xf32> -> vector<8x32xf32>
    %c0_17 = arith.constant 0 : index
    %c0_18 = arith.constant 0 : index
    %28 = vector.load %arg4[%c0_17, %c0_18] : memref<32x32xf32, #tpu.memory_space<vmem>>, vector<32x32xf32>
    %cst_19 = arith.constant dense<0.000000e+00> : vector<8x32xf32>
    %29 = tpu.matmul %27, %28, %cst_19 {dimension_numbers = #tpu.dot_dimension_numbers<[1], [0], [0], [1], [0, 0, 1, 1], [], []>} : vector<8x32xf32>, vector<32x32xf32>, vector<8x32xf32> -> vector<8x32xf32>
    %c0_20 = arith.constant 0 : index
    %c0_21 = arith.constant 0 : index
    %30 = vector.load %arg5[%c0_20, %c0_21] : memref<1x32xf32, #tpu.memory_space<vmem>>, vector<1x32xf32>
    %31 = vector.broadcast %30 : vector<1x32xf32> to vector<8x32xf32>
    %32 = arith.addf %29, %31 : vector<8x32xf32>
    %c0_22 = arith.constant 0 : index
    %c0_23 = arith.constant 0 : index
    %c0_24 = arith.constant 0 : index
    %33 = vector.load %arg8[%c0_22, %c0_23, %c0_24] : memref<1x8x32xf32, #tpu.memory_space<vmem>>, vector<1x8x32xf32>
    %34 = vector.shape_cast %33 : vector<1x8x32xf32> to vector<8x32xf32>
    %35 = vector.shape_cast %32 : vector<8x32xf32> to vector<1x8x32xf32>
    tpu.vector_store %arg8[%c0_22, %c0_23, %c0_24], %35 {strides = array<i32>} : memref<1x8x32xf32, #tpu.memory_space<vmem>>, vector<1x8x32xf32>,
    return
  }
  func.func @transform_0(%arg0: i32) -> (i32, i32, i32) {
    %c0_i32 = arith.constant 0 : i32
    %c0_i32_0 = arith.constant 0 : i32
    %c0_i32_1 = arith.constant 0 : i32
    return %arg0, %c0_i32, %c0_i32_0 : i32, i32, i32
  }
  func.func @transform_1(%arg0: i32) -> (i32, i32) {
    %c0_i32 = arith.constant 0 : i32
    %c0_i32_0 = arith.constant 0 : i32
    %c0_i32_1 = arith.constant 0 : i32
    return %c0_i32, %c0_i32_0 : i32, i32
  }
  func.func @transform_2(%arg0: i32) -> (i32, i32) {
    %c0_i32 = arith.constant 0 : i32
    %c0_i32_0 = arith.constant 0 : i32
    %c0_i32_1 = arith.constant 0 : i32
    return %c0_i32, %c0_i32_0 : i32, i32
  }
  func.func @transform_3(%arg0: i32) -> (i32, i32) {
    %c0_i32 = arith.constant 0 : i32
    %c0_i32_0 = arith.constant 0 : i32
    %c0_i32_1 = arith.constant 0 : i32
    return %c0_i32, %c0_i32_0 : i32, i32
  }
  func.func @transform_4(%arg0: i32) -> (i32, i32) {
    %c0_i32 = arith.constant 0 : i32
    %c0_i32_0 = arith.constant 0 : i32
    %c0_i32_1 = arith.constant 0 : i32
    return %c0_i32, %c0_i32_0 : i32, i32
  }
  func.func @transform_5(%arg0: i32) -> (i32, i32) {
    %c0_i32 = arith.constant 0 : i32
    %c0_i32_0 = arith.constant 0 : i32
    %c0_i32_1 = arith.constant 0 : i32
    return %c0_i32, %c0_i32_0 : i32, i32
  }
  func.func @transform_6(%arg0: i32) -> (i32, i32) {
    %c0_i32 = arith.constant 0 : i32
    %c0_i32_0 = arith.constant 0 : i32
    %c0_i32_1 = arith.constant 0 : i32
    return %c0_i32, %c0_i32_0 : i32, i32
  }
  func.func @transform_7(%arg0: i32) -> (i32, i32, i32) {
    %c0_i32 = arith.constant 0 : i32
    %c0_i32_0 = arith.constant 0 : i32
    %c0_i32_1 = arith.constant 0 : i32
    return %arg0, %c0_i32, %c0_i32_0 : i32, i32, i32
  }
  func.func @transform_8(%arg0: i32) -> (i32, i32, i32) {
    %c0_i32 = arith.constant 0 : i32
    %c0_i32_0 = arith.constant 0 : i32
    %c0_i32_1 = arith.constant 0 : i32
    return %arg0, %c0_i32, %c0_i32_0 : i32, i32, i32
  }
}

</mosaic_0001>

<llo_original>
// kernel: tpu_custom_call.1
$region0: #{tpu_custom_call.1}
  #allocation0 [shape = 'u32[]', space=smem, size = 0x4, offset = 0x4, fixed_abs, tag = 'smem constant byte address 0x4 - core index']
  #allocation1 [shape = 'u32[144,128]{1,0:T(1,128)}', space=vmem, size = 0x12000, scoped, tag = 'internal scratch']
  %s0 = inlined_call_operand.vmem [shape: f32[2,8,32], index: 0, kind: input, shape index: {}]
  %s1 = inlined_call_operand.vmem [shape: f32[32,96], index: 1, kind: input, shape index: {}]
  %s2 = inlined_call_operand.vmem [shape: f32[1,96], index: 2, kind: input, shape index: {}]
  %s3 = inlined_call_operand.hbm [shape: f32[32,32], index: 3, kind: input, shape index: {}]
  %s4 = inlined_call_operand.vmem [shape: f32[1,32], index: 4, kind: input, shape index: {}]
  %s5 = inlined_call_operand.vmem [shape: f32[64,32], index: 5, kind: input, shape index: {}]
  %s6 = inlined_call_operand.vmem [shape: f32[64,64], index: 6, kind: input, shape index: {}]
  %s7 = inlined_call_operand.hbm [shape: f32[2,8,32], index: 7, kind: output, shape index: {0}]
  %s8 = inlined_call_operand.hbm [shape: f32[2,8,64], index: 8, kind: output, shape index: {1}]
  %9 = xla_tuple %s7, %s8
  %s10 = sld [smem:[#allocation0]]
  $region73: #{tpu_custom_call.1} parent=0
    _
  %s12 = ssub.s32 1, %s10
  %s13 = scalar_select 0, %s12, %s10
  $region1: #{tpu_custom_call.1} parent=0
    #allocation2 [shape = 'u8[16384]{0}', space=vmem, size = 0x4000, scoped, tag = 'input window, operand 3, single buffered']
    #allocation3 [shape = 's32[2]{0}', space=sflag, size = 0x8, scoped, tag = 'scoped memory for tpu_custom_call.1']
    #allocation4 [shape = 's32[2]{0}', space=sflag, size = 0x8, scoped, tag = 'scoped memory for tpu_custom_call.1']
    #allocation5 [shape = 'u8[8192]{0}', space=vmem, size = 0x2000, scoped, tag = 'output window, operand 0']
    #allocation6 [shape = 'u8[8192]{0}', space=vmem, size = 0x2000, scoped, tag = 'output window, operand 1']
    #allocation7 [shape = 's32[2]{0}', space=sflag, size = 0x8, scoped, tag = 'scoped memory for tpu_custom_call.1']
    %14 = vsyncpa [#allocation3], 0
    %15 = vsyncpa [#allocation4], 0
    %s16 = scalar_lea.sflag [#allocation4], 1
    %17 = vsyncpa %s16, 0
    %18 = vsyncpa [#allocation7], 0
    %s19 = scalar_lea.sflag [#allocation7], 1
    %20 = vsyncpa %s19, 0
    loop: start=0, step=1, limit=4
    $region2: #{tpu_custom_call.1} parent=1 // loop_pre_header
      _
    $region3: #{tpu_custom_call.1} parent=1 // loop_header
      %s22 = sphi 0, %s26
      %p23 = scmp.ge.s32.totalorder %s22, 4
      %s32 = sphi 0, %s34
      %s35 = sphi 0, %s32
      %s36 = sphi 0, %s35
      %s52 = sphi 0, %s36
      %s56 = sphi 0, %s56
      %s58 = sphi 0, %s56
      %s59 = sphi 0, %s58
      %s73 = sphi 0, %s59
      %s77 = sphi 0, %s77
      %s79 = sphi 0, %s77
      %s80 = sphi 0, %s79
      %s94 = sphi 0, %s80
      %s98 = sphi 0, %s98
      %s100 = sphi 0, %s98
      %s101 = sphi 0, %s100
      %s115 = sphi 0, %s101
      %s119 = sphi 0, %s119
      %s121 = sphi 0, %s119
      %s122 = sphi 0, %s121
      %s136 = sphi 0, %s122
      %s140 = sphi 0, %s140
      %s142 = sphi 0, %s140
      %s143 = sphi 0, %s142
      %s157 = sphi 0, %s143
      %s161 = sphi 0, %s161
      %s163 = sphi 0, %s161
      %s164 = sphi 0, %s163
      %s178 = sphi 0, %s164
      %s184 = sphi 0, %s186
      %s187 = sphi 0, %s184
      %s188 = sphi 0, %s187
      %s204 = sphi 0, %s188
      %s210 = sphi 0, %s212
      %s213 = sphi 0, %s210
      %s214 = sphi 0, %s213
      %s230 = sphi 0, %s214
    $region4: #{tpu_custom_call.1} parent=1 // loop_header_branch
      %25 = sbr.rel (%p23) target = $region8
    $region5: #{tpu_custom_call.1} parent=1 // loop_body
      %s27 = ssub.s32 %s22, 1
      %s28 = ssub.s32 %s22, 2
      %s29 = sadd.s32 %s22, 1
      %s30 = ssub.s32 %s22, %s29
      %p31 = scmp.eq.s32.totalorder %s30, 0
      %s33 = sadd.s32 %s32, 1
      %s34 = scalar_select %p31, %s32, %s33
      %p37 = pneg %p31
      %p38 = scmp.eq.s32.totalorder %s22, 1
      %p39 = por %p37, %p38
      %p40 = scmp.ne.s32.totalorder %s32, %s35
      %p41 = scmp.eq.s32.totalorder %s22, 0
      %p42 = por %p40, %p41
      %p43 = scmp.ne.s32.totalorder %s32, %s35
      %p44 = scmp.eq.s32.totalorder %s27, 1
      %p45 = por %p43, %p44
      %p46 = scmp.ne.s32.totalorder %s35, %s36
      %p47 = scmp.eq.s32.totalorder %s27, 0
      %p48 = por %p46, %p47
      %p49 = scmp.ne.s32.totalorder %s35, %s36
      %p50 = scmp.eq.s32.totalorder %s28, 1
      %p51 = por %p49, %p50
      %p53 = scmp.ne.s32.totalorder %s36, %s52
      %p54 = scmp.eq.s32.totalorder %s28, 0
      %p55 = por %p53, %p54
      %s57 = sadd.s32 %s56, 1
      %p60 = scmp.eq.s32.totalorder %s22, 1
      %p61 = scmp.ne.s32.totalorder %s56, %s58
      %p62 = scmp.eq.s32.totalorder %s22, 0
      %p63 = por %p61, %p62
      %p64 = scmp.ne.s32.totalorder %s56, %s58
      %p65 = scmp.eq.s32.totalorder %s27, 1
      %p66 = por %p64, %p65
      %p67 = scmp.ne.s32.totalorder %s58, %s59
      %p68 = scmp.eq.s32.totalorder %s27, 0
      %p69 = por %p67, %p68
      %p70 = scmp.ne.s32.totalorder %s58, %s59
      %p71 = scmp.eq.s32.totalorder %s28, 1
      %p72 = por %p70, %p71
      %p74 = scmp.ne.s32.totalorder %s59, %s73
      %p75 = scmp.eq.s32.totalorder %s28, 0
      %p76 = por %p74, %p75
      %s78 = sadd.s32 %s77, 1
      %p81 = scmp.eq.s32.totalorder %s22, 1
      %p82 = scmp.ne.s32.totalorder %s77, %s79
      %p83 = scmp.eq.s32.totalorder %s22, 0
      %p84 = por %p82, %p83
      %p85 = scmp.ne.s32.totalorder %s77, %s79
      %p86 = scmp.eq.s32.totalorder %s27, 1
      %p87 = por %p85, %p86
      %p88 = scmp.ne.s32.totalorder %s79, %s80
      %p89 = scmp.eq.s32.totalorder %s27, 0
      %p90 = por %p88, %p89
      %p91 = scmp.ne.s32.totalorder %s79, %s80
      %p92 = scmp.eq.s32.totalorder %s28, 1
      %p93 = por %p91, %p92
      %p95 = scmp.ne.s32.totalorder %s80, %s94
      %p96 = scmp.eq.s32.totalorder %s28, 0
      %p97 = por %p95, %p96
      %s99 = sadd.s32 %s98, 1
      %p102 = scmp.eq.s32.totalorder %s22, 1
      %p103 = scmp.ne.s32.totalorder %s98, %s100
      %p104 = scmp.eq.s32.totalorder %s22, 0
      %p105 = por %p103, %p104
      %p106 = scmp.ne.s32.totalorder %s98, %s100
      %p107 = scmp.eq.s32.totalorder %s27, 1
      %p108 = por %p106, %p107
      %p109 = scmp.ne.s32.totalorder %s100, %s101
      %p110 = scmp.eq.s32.totalorder %s27, 0
      %p111 = por %p109, %p110
      %p112 = scmp.ne.s32.totalorder %s100, %s101
      %p113 = scmp.eq.s32.totalorder %s28, 1
      %p114 = por %p112, %p113
      %p116 = scmp.ne.s32.totalorder %s101, %s115
      %p117 = scmp.eq.s32.totalorder %s28, 0
      %p118 = por %p116, %p117
      %s120 = sadd.s32 %s119, 1
      %p123 = scmp.eq.s32.totalorder %s22, 1
      %p124 = scmp.ne.s32.totalorder %s119, %s121
      %p125 = scmp.eq.s32.totalorder %s22, 0
      %p126 = por %p124, %p125
      %p127 = scmp.ne.s32.totalorder %s119, %s121
      %p128 = scmp.eq.s32.totalorder %s27, 1
      %p129 = por %p127, %p128
      %p130 = scmp.ne.s32.totalorder %s121, %s122
      %p131 = scmp.eq.s32.totalorder %s27, 0
      %p132 = por %p130, %p131
      %p133 = scmp.ne.s32.totalorder %s121, %s122
      %p134 = scmp.eq.s32.totalorder %s28, 1
      %p135 = por %p133, %p134
      %p137 = scmp.ne.s32.totalorder %s122, %s136
      %p138 = scmp.eq.s32.totalorder %s28, 0
      %p139 = por %p137, %p138
      %s141 = sadd.s32 %s140, 1
      %p144 = scmp.eq.s32.totalorder %s22, 1
      %p145 = scmp.ne.s32.totalorder %s140, %s142
      %p146 = scmp.eq.s32.totalorder %s22, 0
      %p147 = por %p145, %p146
      %p148 = scmp.ne.s32.totalorder %s140, %s142
      %p149 = scmp.eq.s32.totalorder %s27, 1
      %p150 = por %p148, %p149
      %p151 = scmp.ne.s32.totalorder %s142, %s143
      %p152 = scmp.eq.s32.totalorder %s27, 0
      %p153 = por %p151, %p152
      %p154 = scmp.ne.s32.totalorder %s142, %s143
      %p155 = scmp.eq.s32.totalorder %s28, 1
      %p156 = por %p154, %p155
      %p158 = scmp.ne.s32.totalorder %s143, %s157
      %p159 = scmp.eq.s32.totalorder %s28, 0
      %p160 = por %p158, %p159
      %s162 = sadd.s32 %s161, 1
      %p165 = scmp.eq.s32.totalorder %s22, 1
      %p166 = scmp.ne.s32.totalorder %s161, %s163
      %p167 = scmp.eq.s32.totalorder %s22, 0
      %p168 = por %p166, %p167
      %p169 = scmp.ne.s32.totalorder %s161, %s163
      %p170 = scmp.eq.s32.totalorder %s27, 1
      %p171 = por %p169, %p170
      %p172 = scmp.ne.s32.totalorder %s163, %s164
      %p173 = scmp.eq.s32.totalorder %s27, 0
      %p174 = por %p172, %p173
      %p175 = scmp.ne.s32.totalorder %s163, %s164
      %p176 = scmp.eq.s32.totalorder %s28, 1
      %p177 = por %p175, %p176
      %p179 = scmp.ne.s32.totalorder %s164, %s178
      %p180 = scmp.eq.s32.totalorder %s28, 0
      %p181 = por %p179, %p180
      %s182 = ssub.s32 %s22, %s29
      %p183 = scmp.eq.s32.totalorder %s182, 0
      %s185 = sadd.s32 %s184, 1
      %s186 = scalar_select %p183, %s184, %s185
      %p189 = pneg %p183
      %p190 = scmp.eq.s32.totalorder %s22, 1
      %p191 = por %p189, %p190
      %p192 = scmp.ne.s32.totalorder %s184, %s187
      %p193 = scmp.eq.s32.totalorder %s22, 0
      %p194 = por %p192, %p193
      %p195 = scmp.ne.s32.totalorder %s184, %s187
      %p196 = scmp.eq.s32.totalorder %s27, 1
      %p197 = por %p195, %p196
      %p198 = scmp.ne.s32.totalorder %s187, %s188
      %p199 = scmp.eq.s32.totalorder %s27, 0
      %p200 = por %p198, %p199
      %p201 = scmp.ne.s32.totalorder %s187, %s188
      %p202 = scmp.eq.s32.totalorder %s28, 1
      %p203 = por %p201, %p202
      %p205 = scmp.ne.s32.totalorder %s188, %s204
      %p206 = scmp.eq.s32.totalorder %s28, 0
      %p207 = por %p205, %p206
      %s208 = ssub.s32 %s22, %s29
      %p209 = scmp.eq.s32.totalorder %s208, 0
      %s211 = sadd.s32 %s210, 1
      %s212 = scalar_select %p209, %s210, %s211
      %p215 = pneg %p209
      %p216 = scmp.eq.s32.totalorder %s22, 1
      %p217 = por %p215, %p216
      %p218 = scmp.ne.s32.totalorder %s210, %s213
      %p219 = scmp.eq.s32.totalorder %s22, 0
      %p220 = por %p218, %p219
      %p221 = scmp.ne.s32.totalorder %s210, %s213
      %p222 = scmp.eq.s32.totalorder %s27, 1
      %p223 = por %p221, %p222
      %p224 = scmp.ne.s32.totalorder %s213, %s214
      %p225 = scmp.eq.s32.totalorder %s27, 0
      %p226 = por %p224, %p225
      %p227 = scmp.ne.s32.totalorder %s213, %s214
      %p228 = scmp.eq.s32.totalorder %s28, 1
      %p229 = por %p227, %p228
      %p231 = scmp.ne.s32.totalorder %s214, %s230
      %p232 = scmp.eq.s32.totalorder %s28, 0
      %p233 = por %p231, %p232
      %p234 = scmp.le.s32.totalorder 1, %s22
      %p235 = scmp.lt.s32.totalorder %s22, 3
      %p236 = pnand %p234, %p235
      %p237 = pneg %p236
      // Predicated region
      $region9: #{tpu_custom_call.1} parent=5 // pred_check
        _
      $region10: #{tpu_custom_call.1} parent=5 // pred_check_branch
        %239 = sbr.rel (%p236) target = $region12
      $region11: #{tpu_custom_call.1} parent=5 // pred_region
        %s240 = ssub.s32 %s22, 1
        // Predicated region
        $region13: #{tpu_custom_call.1} parent=11 // pred_check
          %p241 = pneg %p69
        $region14: #{tpu_custom_call.1} parent=11 // pred_check_branch
          %243 = sbr.rel (%p241) target = $region16
        $region15: #{tpu_custom_call.1} parent=11 // pred_region
          _
        $region16: #{tpu_custom_call.1} parent=11 // pred_fallthru
          _
        // Predicated region
        $region17: #{tpu_custom_call.1} parent=11 // pred_check
          %p244 = pneg %p90
        $region18: #{tpu_custom_call.1} parent=11 // pred_check_branch
          %246 = sbr.rel (%p244) target = $region20
        $region19: #{tpu_custom_call.1} parent=11 // pred_region
          _
        $region20: #{tpu_custom_call.1} parent=11 // pred_fallthru
          _
        // Predicated region
        $region21: #{tpu_custom_call.1} parent=11 // pred_check
          %p247 = pneg %p111
        $region22: #{tpu_custom_call.1} parent=11 // pred_check_branch
          %249 = sbr.rel (%p247) target = $region24
        $region23: #{tpu_custom_call.1} parent=11 // pred_region
          %s251 = ssub.s32 512, 512
          %252 = vsyncadd [#allocation3], %s251
          %s253 = sshll.u32 [#allocation2], 4
          %s254 = int_to_ptr.vmem [resolvable:$true] %s253
          %259 = dma.hbm_to_vmem [thread:$0]  %s3, 512, %s254, [#allocation3], 128, 128, 8
        $region24: #{tpu_custom_call.1} parent=11 // pred_fallthru
          _
        // Predicated region
        $region25: #{tpu_custom_call.1} parent=11 // pred_check
          %p260 = pneg %p132
        $region26: #{tpu_custom_call.1} parent=11 // pred_check_branch
          %262 = sbr.rel (%p260) target = $region28
        $region27: #{tpu_custom_call.1} parent=11 // pred_region
          _
        $region28: #{tpu_custom_call.1} parent=11 // pred_fallthru
          _
        // Predicated region
        $region29: #{tpu_custom_call.1} parent=11 // pred_check
          %p263 = pneg %p153
        $region30: #{tpu_custom_call.1} parent=11 // pred_check_branch
          %265 = sbr.rel (%p263) target = $region32
        $region31: #{tpu_custom_call.1} parent=11 // pred_region
          _
        $region32: #{tpu_custom_call.1} parent=11 // pred_fallthru
          _
        // Predicated region
        $region33: #{tpu_custom_call.1} parent=11 // pred_check
          %p266 = pneg %p174
        $region34: #{tpu_custom_call.1} parent=11 // pred_check_branch
          %268 = sbr.rel (%p266) target = $region36
        $region35: #{tpu_custom_call.1} parent=11 // pred_region
          _
        $region36: #{tpu_custom_call.1} parent=11 // pred_fallthru
          _
      $region12: #{tpu_custom_call.1} parent=5 // pred_fallthru
        _
      %p269 = scmp.lt.s32.totalorder %s22, 2
      // Predicated region
      $region37: #{tpu_custom_call.1} parent=5 // pred_check
        %p270 = pneg %p269
      $region38: #{tpu_custom_call.1} parent=5 // pred_check_branch
        %272 = sbr.rel (%p270) target = $region40
      $region39: #{tpu_custom_call.1} parent=5 // pred_region
        // Predicated region
        $region41: #{tpu_custom_call.1} parent=39 // pred_check
          %p273 = pneg %p42
        $region42: #{tpu_custom_call.1} parent=39 // pred_check_branch
          %275 = sbr.rel (%p273) target = $region44
        $region43: #{tpu_custom_call.1} parent=39 // pred_region
          %p276 = scmp.lt.s32.totalorder %s22, 1
          %s277 = scalar_select %p276, %s22, 1
          %s278 = smul.addr %s277, 8
          %s279 = scalar_lea.vmem %s0, %s278
        $region44: #{tpu_custom_call.1} parent=39 // pred_fallthru
          _
      $region40: #{tpu_custom_call.1} parent=5 // pred_fallthru
        _
      %p280 = scmp.le.s32.totalorder 1, %s22
      %p281 = scmp.lt.s32.totalorder %s22, 3
      %p282 = pnand %p280, %p281
      %p283 = pneg %p282
      // Predicated region
      $region45: #{tpu_custom_call.1} parent=5 // pred_check
        _
      $region46: #{tpu_custom_call.1} parent=5 // pred_check_branch
        %285 = sbr.rel (%p282) target = $region48
      $region47: #{tpu_custom_call.1} parent=5 // pred_region
        %s286 = ssub.s32 %s22, 1
        // Predicated region
        $region49: #{tpu_custom_call.1} parent=47 // pred_check
          %p287 = pneg %p111
        $region50: #{tpu_custom_call.1} parent=47 // pred_check_branch
          %289 = sbr.rel (%p287) target = $region52
        $region51: #{tpu_custom_call.1} parent=47 // pred_region
          %290 = dma.done [#allocation3], 512
        $region52: #{tpu_custom_call.1} parent=47 // pred_fallthru
          _
        %p291 = scmp.lt.s32.totalorder %s27, 1
        %s292 = scalar_select %p291, %s27, 1
        %s293 = smul.addr %s292, 8
        %s294 = scalar_lea.vmem %s0, %s293
        %p295 = pneg %p48
        %p296 = pneg %p45
        %p297 = pneg %p69
        %p298 = pneg %p66
        %p299 = pneg %p90
        %p300 = pneg %p87
        %p301 = pneg %p111
        %p302 = pneg %p108
        %p303 = pneg %p132
        %p304 = pneg %p129
        %p305 = pneg %p153
        %p306 = pneg %p150
        %p307 = pneg %p174
        %p308 = pneg %p171
        %p309 = pneg %p200
        %p310 = pneg %p197
        %s311 = sand.u32 %s187, 1
        %s312 = scalar_lea.sflag [#allocation4], %s311
        %s313 = sand.u32 %s187, 1
        %s314 = smul.addr %s313, 8
        %s315 = scalar_lea.vmem [#allocation5], %s314
        %p316 = pneg %p226
        %p317 = pneg %p223
        %s318 = sand.u32 %s213, 1
        %s319 = scalar_lea.sflag [#allocation7], %s318
        %s320 = sand.u32 %s213, 1
        %s321 = smul.addr %s320, 8
        %s322 = scalar_lea.vmem [#allocation6], %s321
        %p323 = scmp.lt.s32.totalorder %s27, 1
        %s324 = scalar_select %p323, %s27, 1
        %s325 = smul.addr %s324, 8
        %s326 = scalar_lea.vmem %s0, %s325
        %v327 = vld [vmem:[%s326] sm:$0xff]
        %v328 = vld [vmem:[%s1] sm:$0xff]
        %v329 = vld [vmem:[%s1 + $0x8] sm:$0xff]
        %v330 = vld [vmem:[%s1 + $0x10] sm:$0xff]
        %v331 = vld [vmem:[%s1 + $0x18] sm:$0xff]
        %v332 = vld [vmem:[%s2] sm:$0x1]
        %v334 = vlaneseq
        %v335 = vshrl.u32 %v334, 7
        %v336 = vsub.s32 0, %v335
        %v337 = vrot.slane %v332, %v336
        %vm339 = vcmask 261120
        %v341 = vsel %vm339, %v327, 0
        %343 = vmatprep.subr.mxu0 0.0
        %344 = vmatpush1.msra.mxu0 %v328
        %345 = vmatprep.subr.mxu0 0.0
        %346 = vmatpush1.msra.mxu0 %v329
        %347 = vmatprep.subr.mxu0 0.0
        %348 = vmatpush1.msra.mxu0 %v330
        %349 = vmatprep.subr.mxu0 0.0
        %350 = vmatpush1.msra.mxu0 %v331
        %351 = vmatprep.subr.mxu0 0.0
        %352 = vmatpush1.msra.mxu0 0.0
        %353 = vmatprep.subr.mxu0 0.0
        %354 = vmatpush1.msra.mxu0 0.0
        %355 = vmatprep.subr.mxu0 0.0
        %356 = vmatpush1.msra.mxu0 0.0
        %357 = vmatprep.subr.mxu0 0.0
        %358 = vmatpush1.msra.mxu0 0.0
        %359 = vmatprep.subr.mxu0 0.0
        %360 = vmatpush1.msra.mxu0 0.0
        %361 = vmatprep.subr.mxu0 0.0
        %362 = vmatpush1.msra.mxu0 0.0
        %363 = vmatprep.subr.mxu0 0.0
        %364 = vmatpush1.msra.mxu0 0.0
        %365 = vmatprep.subr.mxu0 0.0
        %366 = vmatpush1.msra.mxu0 0.0
        %367 = vmatprep.subr.mxu0 0.0
        %368 = vmatpush1.msra.mxu0 0.0
        %369 = vmatprep.subr.mxu0 0.0
        %370 = vmatpush1.msra.mxu0 0.0
        %371 = vmatprep.subr.mxu0 0.0
        %372 = vmatpush1.msra.mxu0 0.0
        %373 = vmatprep.subr.mxu0 0.0
        %374 = vmatpush1.msra.mxu0 0.0
        %375 = vmatprep.subr.mxu0 0.0
        %376 = vmatpush1.msra.mxu0 0.0
        %377 = vmatprep.subr.mxu0 0.0
        %378 = vmatpush1.msra.mxu0 0.0
        %379 = vmatprep.subr.mxu0 0.0
        %380 = vmatpush1.msra.mxu0 0.0
        %381 = vmatprep.subr.mxu0 0.0
        %382 = vmatpush1.msra.mxu0 0.0
        %383 = vmatprep.subr.mxu0 0.0
        %384 = vmatpush1.msra.mxu0 0.0
        %385 = vmatprep.subr.mxu0 0.0
        %386 = vmatpush1.msra.mxu0 0.0
        %387 = vmatprep.subr.mxu0 0.0
        %388 = vmatpush1.msra.mxu0 0.0
        %389 = vmatprep.subr.mxu0 0.0
        %390 = vmatpush1.msra.mxu0 0.0
        %391 = vmatprep.subr.mxu0 0.0
        %392 = vmatpush1.msra.mxu0 0.0
        %393 = vmatprep.subr.mxu0 0.0
        %394 = vmatpush1.msra.mxu0 0.0
        %395 = vmatprep.subr.mxu0 0.0
        %396 = vmatpush1.msra.mxu0 0.0
        %397 = vmatprep.subr.mxu0 0.0
        %398 = vmatpush1.msra.mxu0 0.0
        %399 = vmatprep.subr.mxu0 0.0
        %400 = vmatpush1.msra.mxu0 0.0
        %401 = vmatprep.subr.mxu0 0.0
        %402 = vmatpush1.msra.mxu0 0.0
        %403 = vmatprep.subr.mxu0 0.0
        %404 = vmatpush1.msra.mxu0 0.0
        %405 = vmatprep.subr.mxu0 0.0
        %406 = vmatpush1.msra.mxu0 0.0
        %407 = vmatprep.mubr.f32.mxu0 0.0
        %408 = vmatmul.mubr.f32.gmra.mrb[0].mxu0 %v341
        %v409 = vpop.f32.mrb[0].mxu0
        %v410 = vadd.f32 %v337, %v409
        %v411 = vpop.f32.mrb[0].mxu0
        %412 = vdwg.mxu0
        %v413 = vld [vmem:[%s5] sm:$0xff]
        %v414 = vld [vmem:[%s5 + $0x8] sm:$0xff]
        %v415 = vld [vmem:[%s5 + $0x10] sm:$0xff]
        %v416 = vld [vmem:[%s5 + $0x18] sm:$0xff]
        %v417 = vld [vmem:[%s5 + $0x20] sm:$0xff]
        %v418 = vld [vmem:[%s5 + $0x28] sm:$0xff]
        %v419 = vld [vmem:[%s5 + $0x30] sm:$0xff]
        %v420 = vld [vmem:[%s5 + $0x38] sm:$0xff]
        %429 = vrot.lane.b32.xlu0 %v413, 32
        %v430 = vpop.permute.xlu0 %429
        %431 = vrot.lane.b32.xlu0 %v414, 32
        %v432 = vpop.permute.xlu0 %431
        %433 = vrot.lane.b32.xlu0 %v415, 32
        %v434 = vpop.permute.xlu0 %433
        %435 = vrot.lane.b32.xlu0 %v416, 32
        %v436 = vpop.permute.xlu0 %435
        %437 = vrot.lane.b32.xlu0 %v417, 32
        %v438 = vpop.permute.xlu0 %437
        %439 = vrot.lane.b32.xlu0 %v418, 32
        %v440 = vpop.permute.xlu0 %439
        %441 = vrot.lane.b32.xlu0 %v419, 32
        %v442 = vpop.permute.xlu0 %441
        %443 = vrot.lane.b32.xlu0 %v420, 32
        %v444 = vpop.permute.xlu0 %443
        %v453 = vmul.f32 %v410, %v430
        %v454 = vmul.f32 %v410, %v432
        %v455 = vmul.f32 %v410, %v434
        %v456 = vmul.f32 %v410, %v436
        %v457 = vmul.f32 %v410, %v438
        %v458 = vmul.f32 %v410, %v440
        %v459 = vmul.f32 %v410, %v442
        %v460 = vmul.f32 %v410, %v444
        %461 = vrot.lane.b32.xlu0 %v413, 64
        %v462 = vpop.permute.xlu0 %461
        %463 = vrot.lane.b32.xlu0 %v414, 64
        %v464 = vpop.permute.xlu0 %463
        %465 = vrot.lane.b32.xlu0 %v415, 64
        %v466 = vpop.permute.xlu0 %465
        %467 = vrot.lane.b32.xlu0 %v416, 64
        %v468 = vpop.permute.xlu0 %467
        %469 = vrot.lane.b32.xlu0 %v417, 64
        %v470 = vpop.permute.xlu0 %469
        %471 = vrot.lane.b32.xlu0 %v418, 64
        %v472 = vpop.permute.xlu0 %471
        %473 = vrot.lane.b32.xlu0 %v419, 64
        %v474 = vpop.permute.xlu0 %473
        %475 = vrot.lane.b32.xlu0 %v420, 64
        %v476 = vpop.permute.xlu0 %475
        %v485 = vmul.f32 %v410, %v462
        %v486 = vmul.f32 %v410, %v464
        %v487 = vmul.f32 %v410, %v466
        %v488 = vmul.f32 %v410, %v468
        %v489 = vmul.f32 %v410, %v470
        %v490 = vmul.f32 %v410, %v472
        %v491 = vmul.f32 %v410, %v474
        %v492 = vmul.f32 %v410, %v476
        %501 = vrot.lane.b32.xlu0 %v453, 96
        %v502 = vpop.permute.xlu0 %501
        %503 = vrot.lane.b32.xlu0 %v454, 96
        %v504 = vpop.permute.xlu0 %503
        %505 = vrot.lane.b32.xlu0 %v455, 96
        %v506 = vpop.permute.xlu0 %505
        %507 = vrot.lane.b32.xlu0 %v456, 96
        %v508 = vpop.permute.xlu0 %507
        %509 = vrot.lane.b32.xlu0 %v457, 96
        %v510 = vpop.permute.xlu0 %509
        %511 = vrot.lane.b32.xlu0 %v458, 96
        %v512 = vpop.permute.xlu0 %511
        %513 = vrot.lane.b32.xlu0 %v459, 96
        %v514 = vpop.permute.xlu0 %513
        %515 = vrot.lane.b32.xlu0 %v460, 96
        %v516 = vpop.permute.xlu0 %515
        %v518 = vsel %vm339, %v410, 0
        %v520 = vsel %vm339, %v502, 0
        %v522 = vsel %vm339, %v504, 0
        %v524 = vsel %vm339, %v506, 0
        %v526 = vsel %vm339, %v508, 0
        %v528 = vsel %vm339, %v510, 0
        %v530 = vsel %vm339, %v512, 0
        %v532 = vsel %vm339, %v514, 0
        %v534 = vsel %vm339, %v516, 0
        %536 = vmatprep.subr.mxu0 0.0
        %537 = vmatpush1.xpose.msra.mxu0 %v520
        %538 = vmatprep.subr.mxu0 0.0
        %539 = vmatpush1.xpose.msra.mxu0 %v522
        %540 = vmatprep.subr.mxu0 0.0
        %541 = vmatpush1.xpose.msra.mxu0 %v524
        %542 = vmatprep.subr.mxu0 0.0
        %543 = vmatpush1.xpose.msra.mxu0 %v526
        %544 = vmatprep.subr.mxu0 0.0
        %545 = vmatpush1.xpose.msra.mxu0 %v528
        %546 = vmatprep.subr.mxu0 0.0
        %547 = vmatpush1.xpose.msra.mxu0 %v530
        %548 = vmatprep.subr.mxu0 0.0
        %549 = vmatpush1.xpose.msra.mxu0 %v532
        %550 = vmatprep.subr.mxu0 0.0
        %551 = vmatpush1.xpose.msra.mxu0 %v534
        %552 = vmatprep.subr.mxu0 0.0
        %553 = vmatpush1.xpose.msra.mxu0 0.0
        %554 = vmatprep.subr.mxu0 0.0
        %555 = vmatpush1.xpose.msra.mxu0 0.0
        %556 = vmatprep.subr.mxu0 0.0
        %557 = vmatpush1.xpose.msra.mxu0 0.0
        %558 = vmatprep.subr.mxu0 0.0
        %559 = vmatpush1.xpose.msra.mxu0 0.0
        %560 = vmatprep.subr.mxu0 0.0
        %561 = vmatpush1.xpose.msra.mxu0 0.0
        %562 = vmatprep.subr.mxu0 0.0
        %563 = vmatpush1.xpose.msra.mxu0 0.0
        %564 = vmatprep.subr.mxu0 0.0
        %565 = vmatpush1.xpose.msra.mxu0 0.0
        %566 = vmatprep.subr.mxu0 0.0
        %567 = vmatpush1.xpose.msra.mxu0 0.0
        %568 = vmatprep.subr.mxu0 0.0
        %569 = vmatpush1.xpose.msra.mxu0 0.0
        %570 = vmatprep.subr.mxu0 0.0
        %571 = vmatpush1.xpose.msra.mxu0 0.0
        %572 = vmatprep.subr.mxu0 0.0
        %573 = vmatpush1.xpose.msra.mxu0 0.0
        %574 = vmatprep.subr.mxu0 0.0
        %575 = vmatpush1.xpose.msra.mxu0 0.0
        %576 = vmatprep.subr.mxu0 0.0
        %577 = vmatpush1.xpose.msra.mxu0 0.0
        %578 = vmatprep.subr.mxu0 0.0
        %579 = vmatpush1.xpose.msra.mxu0 0.0
        %580 = vmatprep.subr.mxu0 0.0
        %581 = vmatpush1.xpose.msra.mxu0 0.0
        %582 = vmatprep.subr.mxu0 0.0
        %583 = vmatpush1.xpose.msra.mxu0 0.0
        %584 = vmatprep.subr.mxu0 0.0
        %585 = vmatpush1.xpose.msra.mxu0 0.0
        %586 = vmatprep.subr.mxu0 0.0
        %587 = vmatpush1.xpose.msra.mxu0 0.0
        %588 = vmatprep.subr.mxu0 0.0
        %589 = vmatpush1.xpose.msra.mxu0 0.0
        %590 = vmatprep.subr.mxu0 0.0
        %591 = vmatpush1.xpose.msra.mxu0 0.0
        %592 = vmatprep.subr.mxu0 0.0
        %593 = vmatpush1.xpose.msra.mxu0 0.0
        %594 = vmatprep.subr.mxu0 0.0
        %595 = vmatpush1.xpose.msra.mxu0 0.0
        %596 = vmatprep.subr.mxu0 0.0
        %597 = vmatpush1.xpose.msra.mxu0 0.0
        %598 = vmatprep.subr.mxu0 0.0
        %599 = vmatpush1.xpose.msra.mxu0 0.0
        %600 = vmatprep.mubr.f32.mxu0 0.0
        %601 = vmatmul.mubr.f32.gmra.mrb[0].mxu0 %v518
        %v602 = vpop.f32.mrb[0].mxu0
        %v603 = vadd.f32 0.0, %v602
        %v604 = vpop.f32.mrb[0].mxu0
        %605 = vdwg.mxu0
        %vm606 = vcmask 523264
        %v607 = vsel %vm606, %v603, -inf
        %608 = vmax.xlane.f32.xlu0 %v607
        %v609 = vpop.xlane.xlu0 %608
        %v610 = vsub.f32 %v603, %v609
        %v611 = vmul.f32 %v610, 1.442695
        %v612 = vpow.pop %v611
        %v613 = vld [vmem:[%s6] sm:$0xff]
        %v614 = vld [vmem:[%s6 + $0x8] sm:$0xff]
        %v615 = vld [vmem:[%s6 + $0x10] sm:$0xff]
        %v616 = vld [vmem:[%s6 + $0x18] sm:$0xff]
        %v617 = vld [vmem:[%s6 + $0x20] sm:$0xff]
        %v618 = vld [vmem:[%s6 + $0x28] sm:$0xff]
        %v619 = vld [vmem:[%s6 + $0x30] sm:$0xff]
        %v620 = vld [vmem:[%s6 + $0x38] sm:$0xff]
        %v622 = vsel %vm606, %v612, 0
        %624 = vmatprep.subr.mxu0 0.0
        %625 = vmatpush1.msra.mxu0 %v613
        %626 = vmatprep.subr.mxu0 0.0
        %627 = vmatpush1.msra.mxu0 %v614
        %628 = vmatprep.subr.mxu0 0.0
        %629 = vmatpush1.msra.mxu0 %v615
        %630 = vmatprep.subr.mxu0 0.0
        %631 = vmatpush1.msra.mxu0 %v616
        %632 = vmatprep.subr.mxu0 0.0
        %633 = vmatpush1.msra.mxu0 %v617
        %634 = vmatprep.subr.mxu0 0.0
        %635 = vmatpush1.msra.mxu0 %v618
        %636 = vmatprep.subr.mxu0 0.0
        %637 = vmatpush1.msra.mxu0 %v619
        %638 = vmatprep.subr.mxu0 0.0
        %639 = vmatpush1.msra.mxu0 %v620
        %640 = vmatprep.subr.mxu0 0.0
        %641 = vmatpush1.msra.mxu0 0.0
        %642 = vmatprep.subr.mxu0 0.0
        %643 = vmatpush1.msra.mxu0 0.0
        %644 = vmatprep.subr.mxu0 0.0
        %645 = vmatpush1.msra.mxu0 0.0
        %646 = vmatprep.subr.mxu0 0.0
        %647 = vmatpush1.msra.mxu0 0.0
        %648 = vmatprep.subr.mxu0 0.0
        %649 = vmatpush1.msra.mxu0 0.0
        %650 = vmatprep.subr.mxu0 0.0
        %651 = vmatpush1.msra.mxu0 0.0
        %652 = vmatprep.subr.mxu0 0.0
        %653 = vmatpush1.msra.mxu0 0.0
        %654 = vmatprep.subr.mxu0 0.0
        %655 = vmatpush1.msra.mxu0 0.0
        %656 = vmatprep.subr.mxu0 0.0
        %657 = vmatpush1.msra.mxu0 0.0
        %658 = vmatprep.subr.mxu0 0.0
        %659 = vmatpush1.msra.mxu0 0.0
        %660 = vmatprep.subr.mxu0 0.0
        %661 = vmatpush1.msra.mxu0 0.0
        %662 = vmatprep.subr.mxu0 0.0
        %663 = vmatpush1.msra.mxu0 0.0
        %664 = vmatprep.subr.mxu0 0.0
        %665 = vmatpush1.msra.mxu0 0.0
        %666 = vmatprep.subr.mxu0 0.0
        %667 = vmatpush1.msra.mxu0 0.0
        %668 = vmatprep.subr.mxu0 0.0
        %669 = vmatpush1.msra.mxu0 0.0
        %670 = vmatprep.subr.mxu0 0.0
        %671 = vmatpush1.msra.mxu0 0.0
        %672 = vmatprep.subr.mxu0 0.0
        %673 = vmatpush1.msra.mxu0 0.0
        %674 = vmatprep.subr.mxu0 0.0
        %675 = vmatpush1.msra.mxu0 0.0
        %676 = vmatprep.subr.mxu0 0.0
        %677 = vmatpush1.msra.mxu0 0.0
        %678 = vmatprep.subr.mxu0 0.0
        %679 = vmatpush1.msra.mxu0 0.0
        %680 = vmatprep.subr.mxu0 0.0
        %681 = vmatpush1.msra.mxu0 0.0
        %682 = vmatprep.subr.mxu0 0.0
        %683 = vmatpush1.msra.mxu0 0.0
        %684 = vmatprep.subr.mxu0 0.0
        %685 = vmatpush1.msra.mxu0 0.0
        %686 = vmatprep.subr.mxu0 0.0
        %687 = vmatpush1.msra.mxu0 0.0
        %688 = vmatprep.mubr.f32.mxu0 0.0
        %689 = vmatmul.mubr.f32.gmra.mrb[0].mxu0 %v622
        %v690 = vpop.f32.mrb[0].mxu0
        %v691 = vadd.f32 0.0, %v690
        %v692 = vpop.f32.mrb[0].mxu0
        %693 = vdwg.mxu0
        %v694 = vrcp.pop %v691
        %v695 = vmul.f32 %v612, %v694
        %696 = vst.msk [vmem:[%s322] sm:$0xff] %vm606, %v695
        %705 = vrot.lane.b32.xlu0 %v485, 64
        %v706 = vpop.permute.xlu0 %705
        %707 = vrot.lane.b32.xlu0 %v486, 64
        %v708 = vpop.permute.xlu0 %707
        %709 = vrot.lane.b32.xlu0 %v487, 64
        %v710 = vpop.permute.xlu0 %709
        %711 = vrot.lane.b32.xlu0 %v488, 64
        %v712 = vpop.permute.xlu0 %711
        %713 = vrot.lane.b32.xlu0 %v489, 64
        %v714 = vpop.permute.xlu0 %713
        %715 = vrot.lane.b32.xlu0 %v490, 64
        %v716 = vpop.permute.xlu0 %715
        %717 = vrot.lane.b32.xlu0 %v491, 64
        %v718 = vpop.permute.xlu0 %717
        %719 = vrot.lane.b32.xlu0 %v492, 64
        %v720 = vpop.permute.xlu0 %719
        %v730 = vsel %vm606, %v695, 0
        %732 = vmatprep.subr.mxu0 0.0
        %733 = vmatpush1.msra.mxu0 %v706
        %734 = vmatprep.subr.mxu0 0.0
        %735 = vmatpush1.msra.mxu0 %v708
        %736 = vmatprep.subr.mxu0 0.0
        %737 = vmatpush1.msra.mxu0 %v710
        %738 = vmatprep.subr.mxu0 0.0
        %739 = vmatpush1.msra.mxu0 %v712
        %740 = vmatprep.subr.mxu0 0.0
        %741 = vmatpush1.msra.mxu0 %v714
        %742 = vmatprep.subr.mxu0 0.0
        %743 = vmatpush1.msra.mxu0 %v716
        %744 = vmatprep.subr.mxu0 0.0
        %745 = vmatpush1.msra.mxu0 %v718
        %746 = vmatprep.subr.mxu0 0.0
        %747 = vmatpush1.msra.mxu0 %v720
        %748 = vmatprep.subr.mxu0 0.0
        %749 = vmatpush1.msra.mxu0 0.0
        %750 = vmatprep.subr.mxu0 0.0
        %751 = vmatpush1.msra.mxu0 0.0
        %752 = vmatprep.subr.mxu0 0.0
        %753 = vmatpush1.msra.mxu0 0.0
        %754 = vmatprep.subr.mxu0 0.0
        %755 = vmatpush1.msra.mxu0 0.0
        %756 = vmatprep.subr.mxu0 0.0
        %757 = vmatpush1.msra.mxu0 0.0
        %758 = vmatprep.subr.mxu0 0.0
        %759 = vmatpush1.msra.mxu0 0.0
        %760 = vmatprep.subr.mxu0 0.0
        %761 = vmatpush1.msra.mxu0 0.0
        %762 = vmatprep.subr.mxu0 0.0
        %763 = vmatpush1.msra.mxu0 0.0
        %764 = vmatprep.subr.mxu0 0.0
        %765 = vmatpush1.msra.mxu0 0.0
        %766 = vmatprep.subr.mxu0 0.0
        %767 = vmatpush1.msra.mxu0 0.0
        %768 = vmatprep.subr.mxu0 0.0
        %769 = vmatpush1.msra.mxu0 0.0
        %770 = vmatprep.subr.mxu0 0.0
        %771 = vmatpush1.msra.mxu0 0.0
        %772 = vmatprep.subr.mxu0 0.0
        %773 = vmatpush1.msra.mxu0 0.0
        %774 = vmatprep.subr.mxu0 0.0
        %775 = vmatpush1.msra.mxu0 0.0
        %776 = vmatprep.subr.mxu0 0.0
        %777 = vmatpush1.msra.mxu0 0.0
        %778 = vmatprep.subr.mxu0 0.0
        %779 = vmatpush1.msra.mxu0 0.0
        %780 = vmatprep.subr.mxu0 0.0
        %781 = vmatpush1.msra.mxu0 0.0
        %782 = vmatprep.subr.mxu0 0.0
        %783 = vmatpush1.msra.mxu0 0.0
        %784 = vmatprep.subr.mxu0 0.0
        %785 = vmatpush1.msra.mxu0 0.0
        %786 = vmatprep.subr.mxu0 0.0
        %787 = vmatpush1.msra.mxu0 0.0
        %788 = vmatprep.subr.mxu0 0.0
        %789 = vmatpush1.msra.mxu0 0.0
        %790 = vmatprep.subr.mxu0 0.0
        %791 = vmatpush1.msra.mxu0 0.0
        %792 = vmatprep.subr.mxu0 0.0
        %793 = vmatpush1.msra.mxu0 0.0
        %794 = vmatprep.subr.mxu0 0.0
        %795 = vmatpush1.msra.mxu0 0.0
        %796 = vmatprep.mubr.f32.mxu0 0.0
        %797 = vmatmul.mubr.f32.gmra.mrb[0].mxu0 %v730
        %v798 = vpop.f32.mrb[0].mxu0
        %v799 = vadd.f32 0.0, %v798
        %v800 = vpop.f32.mrb[0].mxu0
        %801 = vdwg.mxu0
        %v802 = vld [vmem:[#allocation2] sm:$0xff]
        %v803 = vld [vmem:[#allocation2 + $0x8] sm:$0xff]
        %v804 = vld [vmem:[#allocation2 + $0x10] sm:$0xff]
        %v805 = vld [vmem:[#allocation2 + $0x18] sm:$0xff]
        %v806 = vld [vmem:[%s4] sm:$0x1]
        %v808 = vlaneseq
        %v809 = vshrl.u32 %v808, 7
        %v810 = vsub.s32 0, %v809
        %v811 = vrot.slane %v806, %v810
        %v814 = vsel %vm339, %v799, 0
        %816 = vmatprep.subr.mxu0 0.0
        %817 = vmatpush1.msra.mxu0 %v802
        %818 = vmatprep.subr.mxu0 0.0
        %819 = vmatpush1.msra.mxu0 %v803
        %820 = vmatprep.subr.mxu0 0.0
        %821 = vmatpush1.msra.mxu0 %v804
        %822 = vmatprep.subr.mxu0 0.0
        %823 = vmatpush1.msra.mxu0 %v805
        %824 = vmatprep.subr.mxu0 0.0
        %825 = vmatpush1.msra.mxu0 0.0
        %826 = vmatprep.subr.mxu0 0.0
        %827 = vmatpush1.msra.mxu0 0.0
        %828 = vmatprep.subr.mxu0 0.0
        %829 = vmatpush1.msra.mxu0 0.0
        %830 = vmatprep.subr.mxu0 0.0
        %831 = vmatpush1.msra.mxu0 0.0
        %832 = vmatprep.subr.mxu0 0.0
        %833 = vmatpush1.msra.mxu0 0.0
        %834 = vmatprep.subr.mxu0 0.0
        %835 = vmatpush1.msra.mxu0 0.0
        %836 = vmatprep.subr.mxu0 0.0
        %837 = vmatpush1.msra.mxu0 0.0
        %838 = vmatprep.subr.mxu0 0.0
        %839 = vmatpush1.msra.mxu0 0.0
        %840 = vmatprep.subr.mxu0 0.0
        %841 = vmatpush1.msra.mxu0 0.0
        %842 = vmatprep.subr.mxu0 0.0
        %843 = vmatpush1.msra.mxu0 0.0
        %844 = vmatprep.subr.mxu0 0.0
        %845 = vmatpush1.msra.mxu0 0.0
        %846 = vmatprep.subr.mxu0 0.0
        %847 = vmatpush1.msra.mxu0 0.0
        %848 = vmatprep.subr.mxu0 0.0
        %849 = vmatpush1.msra.mxu0 0.0
        %850 = vmatprep.subr.mxu0 0.0
        %851 = vmatpush1.msra.mxu0 0.0
        %852 = vmatprep.subr.mxu0 0.0
        %853 = vmatpush1.msra.mxu0 0.0
        %854 = vmatprep.subr.mxu0 0.0
        %855 = vmatpush1.msra.mxu0 0.0
        %856 = vmatprep.subr.mxu0 0.0
        %857 = vmatpush1.msra.mxu0 0.0
        %858 = vmatprep.subr.mxu0 0.0
        %859 = vmatpush1.msra.mxu0 0.0
        %860 = vmatprep.subr.mxu0 0.0
        %861 = vmatpush1.msra.mxu0 0.0
        %862 = vmatprep.subr.mxu0 0.0
        %863 = vmatpush1.msra.mxu0 0.0
        %864 = vmatprep.subr.mxu0 0.0
        %865 = vmatpush1.msra.mxu0 0.0
        %866 = vmatprep.subr.mxu0 0.0
        %867 = vmatpush1.msra.mxu0 0.0
        %868 = vmatprep.subr.mxu0 0.0
        %869 = vmatpush1.msra.mxu0 0.0
        %870 = vmatprep.subr.mxu0 0.0
        %871 = vmatpush1.msra.mxu0 0.0
        %872 = vmatprep.subr.mxu0 0.0
        %873 = vmatpush1.msra.mxu0 0.0
        %874 = vmatprep.subr.mxu0 0.0
        %875 = vmatpush1.msra.mxu0 0.0
        %876 = vmatprep.subr.mxu0 0.0
        %877 = vmatpush1.msra.mxu0 0.0
        %878 = vmatprep.subr.mxu0 0.0
        %879 = vmatpush1.msra.mxu0 0.0
        %880 = vmatprep.mubr.f32.mxu0 0.0
        %881 = vmatmul.mubr.f32.gmra.mrb[0].mxu0 %v814
        %v882 = vpop.f32.mrb[0].mxu0
        %v883 = vadd.f32 %v811, %v882
        %v884 = vpop.f32.mrb[0].mxu0
        %885 = vdwg.mxu0
        %886 = vst.msk [vmem:[%s315] sm:$0xff] %vm339, %v883
        %s887 = sand.u32 %s187, 1
        %s888 = scalar_lea.sflag [#allocation4], %s887
        %s889 = sand.u32 %s187, 1
        %s890 = smul.addr %s889, 8
        %s891 = scalar_lea.vmem [#allocation5], %s890
        %s892 = sand.u32 %s213, 1
        %s893 = scalar_lea.sflag [#allocation7], %s892
        %s894 = sand.u32 %s213, 1
        %s895 = smul.addr %s894, 8
        %s896 = scalar_lea.vmem [#allocation6], %s895
        // Predicated region
        $region53: #{tpu_custom_call.1} parent=47 // pred_check
          %p897 = pneg %p197
        $region54: #{tpu_custom_call.1} parent=47 // pred_check_branch
          %899 = sbr.rel (%p897) target = $region56
        $region55: #{tpu_custom_call.1} parent=47 // pred_region
          %s901 = ssub.s32 128, 128
          %902 = vsyncadd %s888, %s901
          %s903 = smul.addr %s27, 128
          %s904 = scalar_lea.hbm %s7, %s903
          %s906 = sshll.u32 %s891, 4
          %s907 = int_to_ptr.vmem [resolvable:$true] %s906
          %909 = dma.vmem_to_hbm [thread:$0]  %s907, 128, %s904, %s888
        $region56: #{tpu_custom_call.1} parent=47 // pred_fallthru
          _
        // Predicated region
        $region57: #{tpu_custom_call.1} parent=47 // pred_check
          %p910 = pneg %p223
        $region58: #{tpu_custom_call.1} parent=47 // pred_check_branch
          %912 = sbr.rel (%p910) target = $region60
        $region59: #{tpu_custom_call.1} parent=47 // pred_region
          %s914 = ssub.s32 128, 128
          %915 = vsyncadd %s893, %s914
          %s916 = smul.addr %s27, 128
          %s917 = scalar_lea.hbm %s8, %s916
          %s919 = sshll.u32 %s896, 4
          %s920 = int_to_ptr.vmem [resolvable:$true] %s919
          %922 = dma.vmem_to_hbm [thread:$0]  %s920, 128, %s917, %s893
        $region60: #{tpu_custom_call.1} parent=47 // pred_fallthru
          _
      $region48: #{tpu_custom_call.1} parent=5 // pred_fallthru
        _
      %p923 = scmp.le.s32.totalorder 2, %s22
      // Predicated region
      $region61: #{tpu_custom_call.1} parent=5 // pred_check
        %p924 = pneg %p923
      $region62: #{tpu_custom_call.1} parent=5 // pred_check_branch
        %926 = sbr.rel (%p924) target = $region64
      $region63: #{tpu_custom_call.1} parent=5 // pred_region
        %s927 = ssub.s32 %s22, 2
        // Predicated region
        $region65: #{tpu_custom_call.1} parent=63 // pred_check
          %p928 = pneg %p203
        $region66: #{tpu_custom_call.1} parent=63 // pred_check_branch
          %930 = sbr.rel (%p928) target = $region68
        $region67: #{tpu_custom_call.1} parent=63 // pred_region
          %s931 = sand.u32 %s188, 1
          %s932 = scalar_lea.sflag [#allocation4], %s931
          %s933 = sand.u32 %s188, 1
          %s934 = smul.addr %s933, 8
          %s935 = scalar_lea.vmem [#allocation5], %s934
          %936 = dma.done %s932, 128
        $region68: #{tpu_custom_call.1} parent=63 // pred_fallthru
          _
        // Predicated region
        $region69: #{tpu_custom_call.1} parent=63 // pred_check
          %p937 = pneg %p229
        $region70: #{tpu_custom_call.1} parent=63 // pred_check_branch
          %939 = sbr.rel (%p937) target = $region72
        $region71: #{tpu_custom_call.1} parent=63 // pred_region
          %s940 = sand.u32 %s214, 1
          %s941 = scalar_lea.sflag [#allocation7], %s940
          %s942 = sand.u32 %s214, 1
          %s943 = smul.addr %s942, 8
          %s944 = scalar_lea.vmem [#allocation6], %s943
          %945 = dma.done %s941, 128
        $region72: #{tpu_custom_call.1} parent=63 // pred_fallthru
          _
      $region64: #{tpu_custom_call.1} parent=5 // pred_fallthru
        _
    $region6: #{tpu_custom_call.1} parent=1 // loop_footer
      %s26 = sadd.s32 1, %s22
    $region7: #{tpu_custom_call.1} parent=1 // loop_footer_branch
      %21 = sbr.rel target = $region3
    $region8: #{tpu_custom_call.1} parent=1 // loop_exit
      _
    %946 = vsyncpa [#allocation3], 1
    %s947 = scalar_lea.sflag [#allocation3], 1
    %948 = vsyncpa %s947, 1
    %949 = vsyncpa [#allocation4], 1
    %s950 = scalar_lea.sflag [#allocation4], 1
    %951 = vsyncpa %s950, 1
    %952 = vsyncpa [#allocation7], 1
    %s953 = scalar_lea.sflag [#allocation7], 1
    %954 = vsyncpa %s953, 1

</llo_original>
